<compile_context>
chip_gen: v6e
topology: v6e:2x2x1
jax: 0.10.0
libtpu: 0.0.40
codegen_flags: <defaults>
</compile_context>

<pallas_src>
import functools

import jax
import jax.numpy as jnp
from jax.experimental import pallas as pl
from jax.experimental.pallas import tpu as pltpu

HIDDEN = 256  # fixed by the PyTorch module (fc1/fc2 are 256-wide)


def _round_up(x, m):
    return (x + m - 1) // m * m


def _cdiv(a, b):
    return -(-a // b)


def actor_kernel(x_ref, w_ref, b_ref, o_ref, *, input_dim, in_pad, hidden, out_pad):
    # x_ref: (TB, input_dim) bf16                -- one batch tile of states
    # w_ref: (in_pad + 2*hidden, hidden) bf16    -- [w1 (row-pad) ; w2 ; w3 (col-pad to out_pad, rest 0)]
    # b_ref: (3, hidden) f32                     -- [b1 ; b2 ; b3 (col-pad to out_pad, rest 0)]
    # o_ref: (TB, out_pad) f32                   -- lane-dense (out_pad is a multiple of 128)
    x = x_ref[...]
    if input_dim != in_pad:
        # Pad features to the slab's (sublane-aligned) w1 row count; padded w1
        # rows are zero so the extra columns are inert.
        x = jnp.concatenate(
            [x, jnp.zeros((x.shape[0], in_pad - input_dim), x.dtype)], axis=1)

    # fc1 + relu
    h = jnp.dot(x, w_ref[0:in_pad, :], preferred_element_type=jnp.float32)
    h = jnp.maximum(h + b_ref[0:1, :], 0.0)

    # fc2 + relu
    h = jnp.dot(h.astype(jnp.bfloat16), w_ref[in_pad:in_pad + hidden, :],
                preferred_element_type=jnp.float32)
    h = jnp.maximum(h + b_ref[1:2, :], 0.0)

    # mu + tanh: only the first out_pad (=128) lanes of the w3 rows are used,
    # so this matmul is N=128 and the store below is a full lane-dense tile.
    h = jnp.dot(h.astype(jnp.bfloat16),
                w_ref[in_pad + hidden:in_pad + 2 * hidden, 0:out_pad],
                preferred_element_type=jnp.float32)
    o_ref[...] = jnp.tanh(h + b_ref[2:3, 0:out_pad]).astype(o_ref.dtype)


def pack_actor_params(w1, b1, w2, b2, w3, b3):
    """Pack the Actor's 6 parameter arrays into a bf16 weight slab + f32 bias
    stack. Call once per parameter update, NOT per forward pass."""
    input_dim, hidden = w1.shape
    n_actions = w3.shape[1]
    in_pad = _round_up(max(input_dim, 16), 16)   # bf16 sublane tile = 16 rows
    out_pad = _round_up(n_actions, 128)          # lane tile = 128
    assert out_pad <= hidden, "n_actions > hidden not supported by slab packing"

    w1p = jnp.zeros((in_pad, hidden), jnp.float32).at[:input_dim, :].set(w1)
    # w3 lives in the first out_pad columns of its slab rows; columns
    # [n_actions, hidden) are zero and columns >= out_pad are never read.
    w3p = jnp.zeros((hidden, hidden), jnp.float32).at[:, :n_actions].set(w3)
    w_slab = jnp.concatenate([w1p, w2, w3p], axis=0).astype(jnp.bfloat16)

    b3p = jnp.zeros((1, hidden), jnp.float32).at[:, :n_actions].set(
        b3.reshape(1, -1))
    b_stack = jnp.concatenate(
        [b1.reshape(1, hidden), b2.reshape(1, hidden), b3p], axis=0
    ).astype(jnp.float32)
    return w_slab, b_stack


@functools.partial(jax.jit, static_argnames=("input_dim", "n_actions"))
def actor_forward(state, w_slab, b_stack, *, input_dim, n_actions):
    batch = state.shape[0]
    hidden = b_stack.shape[1]
    in_pad = w_slab.shape[0] - 2 * hidden
    out_pad = _round_up(n_actions, 128)

    # Batch tiling:
    #  - batch <= 256: one grid step (latency path, no tile-split overhead).
    #  - batch  > 256: >=2 nearly-equal tiles of <=512 rows each, so the
    #    "parallel" axis amortizes the ~0.35us per-step cost and shards across
    #    the two TensorCores on v7x (no-op on v5e/v6e).
    batch_r = _round_up(batch, 8)
    if batch_r <= 256:
        tb = batch_r
    else:
        n_tiles = max(2, _cdiv(batch_r, 512))
        tb = _round_up(_cdiv(batch_r, n_tiles), 16)
    batch_pad = _round_up(batch_r, tb)

    # bf16 state feeds the MXU directly; only the batch dim is padded here
    # (feature-dim padding happens in-kernel on VMEM-resident data).
    x = state.astype(jnp.bfloat16)
    if batch_pad != batch:
        x = jnp.pad(x, ((0, batch_pad - batch), (0, 0)))

    kernel = functools.partial(
        actor_kernel, input_dim=input_dim, in_pad=in_pad, hidden=hidden,
        out_pad=out_pad)

    out = pl.pallas_call(
        kernel,
        out_shape=jax.ShapeDtypeStruct((batch_pad, out_pad), jnp.float32),
        grid=(batch_pad // tb,),
        in_specs=[
            pl.BlockSpec((tb, input_dim), lambda i: (i, 0)),                   # states (bf16)
            pl.BlockSpec((in_pad + 2 * hidden, hidden), lambda i: (0, 0)),     # weight slab (resident)
            pl.BlockSpec((3, hidden), lambda i: (0, 0)),                       # bias stack (resident)
        ],
        out_specs=pl.BlockSpec((tb, out_pad), lambda i: (i, 0)),
        compiler_params=pltpu.CompilerParams(
            dimension_semantics=("parallel",)),
    )(x, w_slab, b_stack)
    return out[:batch, :n_actions]


def init_linear(key, fan_in, fan_out):
    # Deterministic init mimicking PyTorch nn.Linear default:
    # U(-1/sqrt(fan_in), 1/sqrt(fan_in)) for both weight and bias.
    kw, kb = jax.random.split(key)
    bound = 1.0 / jnp.sqrt(fan_in)
    w = jax.random.uniform(kw, (fan_in, fan_out), jnp.float32, -bound, bound)
    b = jax.random.uniform(kb, (1, fan_out), jnp.float32, -bound, bound)
    return w, b


if __name__ == "__main__":
    key = jax.random.PRNGKey(0)
    k_state, k1, k2, k3 = jax.random.split(key, 4)

    batch = 8
    input_dim = 16      # e.g. state dimension of the environment
    n_actions = 4

    state = jax.random.normal(k_state, (batch, input_dim), jnp.float32)

    w1, b1 = init_linear(k1, input_dim, HIDDEN)   # fc1
    w2, b2 = init_linear(k2, HIDDEN, HIDDEN)      # fc2
    w3, b3 = init_linear(k3, HIDDEN, n_actions)   # mu

    # Pack once (per parameter update), then run the kernel.
    w_slab, b_stack = pack_actor_params(w1, b1, w2, b2, w3, b3)
    out = actor_forward(state, w_slab, b_stack,
                        input_dim=input_dim, n_actions=n_actions)
    out = jax.block_until_ready(out)

    # Pure-JAX f32 reference (PyTorch semantics). Tolerance relaxed because the
    # kernel intentionally uses bf16 weights/activations on the MXU with f32
    # accumulation.
    h = jnp.maximum(state @ w1 + b1, 0.0)
    h = jnp.maximum(h @ w2 + b2, 0.0)
    ref = jnp.tanh(h @ w3 + b3)
    assert out.shape == (batch, n_actions)
    assert jnp.allclose(out, ref, atol=2e-2, rtol=2e-2), \
        f"max abs err = {float(jnp.max(jnp.abs(out - ref)))}"

    print("KERNEL_OK")
</pallas_src>

<mosaic_0001>
module attributes {stable_mosaic.version = 11 : i64} {
  func.func @actor_kernel(%arg0: i32, %arg1: memref<8x16xbf16, #tpu.memory_space<vmem>>, %arg2: memref<528x256xbf16, #tpu.memory_space<vmem>>, %arg3: memref<3x256xf32, #tpu.memory_space<vmem>>, %arg4: memref<8x128xf32, #tpu.memory_space<vmem>>) attributes {dimension_semantics = [#tpu.dimension_semantics<parallel>], iteration_bounds = array<i64: 1>, scalar_prefetch = 0 : i64, scratch_operands = 0 : i64, tpu.core_type = #tpu.core_type<tc>, window_params = [{transform_indices = @transform_0, window_bounds = array<i64: 8, 16>}, {pipeline_mode = #tpu.pipeline_mode<synchronous>, transform_indices = @transform_1, window_bounds = array<i64: 528, 256>}, {pipeline_mode = #tpu.pipeline_mode<synchronous>, transform_indices = @transform_2, window_bounds = array<i64: 3, 256>}, {transform_indices = @transform_3, window_bounds = array<i64: 8, 128>}]} {
    %c0 = arith.constant 0 : index
    %c0_0 = arith.constant 0 : index
    %0 = vector.load %arg1[%c0, %c0_0] : memref<8x16xbf16, #tpu.memory_space<vmem>>, vector<8x16xbf16>
    %c0_1 = arith.constant 0 : index
    %c0_2 = arith.constant 0 : index
    %1 = vector.load %arg2[%c0_1, %c0_2] : memref<528x256xbf16, #tpu.memory_space<vmem>>, vector<16x256xbf16>
    %cst = arith.constant dense<0.000000e+00> : vector<8x256xf32>
    %2 = tpu.matmul %0, %1, %cst {dimension_numbers = #tpu.dot_dimension_numbers<[1], [0], [0], [1], [0, 0, 1, 1], [], []>} : vector<8x16xbf16>, vector<16x256xbf16>, vector<8x256xf32> -> vector<8x256xf32>
    %c0_3 = arith.constant 0 : index
    %c0_4 = arith.constant 0 : index
    %3 = vector.load %arg3[%c0_3, %c0_4] : memref<3x256xf32, #tpu.memory_space<vmem>>, vector<1x256xf32>
    %4 = vector.broadcast %3 : vector<1x256xf32> to vector<8x256xf32>
    %5 = arith.addf %2, %4 : vector<8x256xf32>
    %cst_5 = arith.constant 0.000000e+00 : f32
    %6 = vector.broadcast %cst_5 : f32 to vector<8x256xf32>
    %7 = arith.maximumf %5, %6 : vector<8x256xf32>
    %8 = arith.truncf %7 : vector<8x256xf32> to vector<8x256xbf16>
    %c16 = arith.constant 16 : index
    %c0_6 = arith.constant 0 : index
    %9 = vector.load %arg2[%c16, %c0_6] : memref<528x256xbf16, #tpu.memory_space<vmem>>, vector<256x256xbf16>
    %cst_7 = arith.constant dense<0.000000e+00> : vector<8x256xf32>
    %10 = tpu.matmul %8, %9, %cst_7 {dimension_numbers = #tpu.dot_dimension_numbers<[1], [0], [0], [1], [0, 0, 1, 1], [], []>} : vector<8x256xbf16>, vector<256x256xbf16>, vector<8x256xf32> -> vector<8x256xf32>
    %c1 = arith.constant 1 : index
    %c0_8 = arith.constant 0 : index
    %11 = vector.load %arg3[%c1, %c0_8] : memref<3x256xf32, #tpu.memory_space<vmem>>, vector<1x256xf32>
    %12 = vector.broadcast %11 : vector<1x256xf32> to vector<8x256xf32>
    %13 = arith.addf %10, %12 : vector<8x256xf32>
    %cst_9 = arith.constant 0.000000e+00 : f32
    %14 = vector.broadcast %cst_9 : f32 to vector<8x256xf32>
    %15 = arith.maximumf %13, %14 : vector<8x256xf32>
    %16 = arith.truncf %15 : vector<8x256xf32> to vector<8x256xbf16>
    %c272 = arith.constant 272 : index
    %c0_10 = arith.constant 0 : index
    %17 = vector.load %arg2[%c272, %c0_10] : memref<528x256xbf16, #tpu.memory_space<vmem>>, vector<256x128xbf16>
    %cst_11 = arith.constant dense<0.000000e+00> : vector<8x128xf32>
    %18 = tpu.matmul %16, %17, %cst_11 {dimension_numbers = #tpu.dot_dimension_numbers<[1], [0], [0], [1], [0, 0, 1, 1], [], []>} : vector<8x256xbf16>, vector<256x128xbf16>, vector<8x128xf32> -> vector<8x128xf32>
    %c2 = arith.constant 2 : index
    %c0_12 = arith.constant 0 : index
    %19 = vector.load %arg3[%c2, %c0_12] : memref<3x256xf32, #tpu.memory_space<vmem>>, vector<1x128xf32>
    %20 = vector.broadcast %19 : vector<1x128xf32> to vector<8x128xf32>
    %21 = arith.addf %18, %20 : vector<8x128xf32>
    %22 = math.tanh %21 : vector<8x128xf32>
    %c0_13 = arith.constant 0 : index
    %c0_14 = arith.constant 0 : index
    %23 = vector.load %arg4[%c0_13, %c0_14] : memref<8x128xf32, #tpu.memory_space<vmem>>, vector<8x128xf32>
    tpu.vector_store %arg4[%c0_13, %c0_14], %22 {strides = array<i32>} : memref<8x128xf32, #tpu.memory_space<vmem>>, vector<8x128xf32>,
    return
  }
  func.func @transform_0(%arg0: i32) -> (i32, i32) {
    %c0_i32 = arith.constant 0 : i32
    %c0_i32_0 = arith.constant 0 : i32
    return %arg0, %c0_i32 : i32, i32
  }
  func.func @transform_1(%arg0: i32) -> (i32, i32) {
    %c0_i32 = arith.constant 0 : i32
    %c0_i32_0 = arith.constant 0 : i32
    %c0_i32_1 = arith.constant 0 : i32
    return %c0_i32, %c0_i32_0 : i32, i32
  }
  func.func @transform_2(%arg0: i32) -> (i32, i32) {
    %c0_i32 = arith.constant 0 : i32
    %c0_i32_0 = arith.constant 0 : i32
    %c0_i32_1 = arith.constant 0 : i32
    return %c0_i32, %c0_i32_0 : i32, i32
  }
  func.func @transform_3(%arg0: i32) -> (i32, i32) {
    %c0_i32 = arith.constant 0 : i32
    %c0_i32_0 = arith.constant 0 : i32
    return %arg0, %c0_i32 : i32, i32
  }
}

</mosaic_0001>

<llo_original>
// kernel: actor_forward.1
$region0: #{actor_forward.1}
  #allocation0 [shape = 'u32[]', space=smem, size = 0x4, offset = 0x4, fixed_abs, tag = 'smem constant byte address 0x4 - core index']
  #allocation1 [shape = 'u32[144,128]{1,0:T(1,128)}', space=vmem, size = 0x12000, scoped, tag = 'internal scratch']
  %s0 = inlined_call_operand.vmem [shape: bf16[8,16], index: 0, kind: input, shape index: {}]
  %s1 = inlined_call_operand.hbm [shape: bf16[528,256], index: 1, kind: input, shape index: {}]
  %s2 = inlined_call_operand.vmem [shape: f32[3,256], index: 2, kind: input, shape index: {}]
  %s3 = inlined_call_operand.vmem [shape: f32[8,128], index: 3, kind: output, shape index: {}]
  %s4 = sld [smem:[#allocation0]]
  $region26: #{actor_forward.1} parent=0
    _
  %s6 = ssub.s32 1, %s4
  %s7 = scalar_select 0, %s6, %s4
  $region1: #{actor_forward.1} parent=0
    #allocation2 [shape = 'u8[270336]{0}', space=vmem, size = 0x42000, scoped, tag = 'input window, operand 1, single buffered']
    #allocation3 [shape = 's32[1]{0}', space=sflag, size = 0x4, scoped, tag = 'scoped memory for actor_forward.1']
    %8 = vsyncpa [#allocation3], 0
    // Predicated region
    $region2: #{actor_forward.1} parent=1 // pred_check
      _
    $region3: #{actor_forward.1} parent=1 // pred_check_branch
      %10 = sbr.rel (0) target = $region5
    $region4: #{actor_forward.1} parent=1 // pred_region
      _
    $region5: #{actor_forward.1} parent=1 // pred_fallthru
      _
    // Predicated region
    $region6: #{actor_forward.1} parent=1 // pred_check
      _
    $region7: #{actor_forward.1} parent=1 // pred_check_branch
      %12 = sbr.rel (0) target = $region9
    $region8: #{actor_forward.1} parent=1 // pred_region
      %s14 = ssub.s32 8448, 8448
      %15 = vsyncadd [#allocation3], %s14
      %s16 = sshll.u32 [#allocation2], 4
      %s17 = int_to_ptr.vmem [resolvable:$true] %s16
      %22 = dma.hbm_to_vmem [thread:$0]  %s1, 8448, %s17, [#allocation3], 128, 128, 8
    $region9: #{actor_forward.1} parent=1 // pred_fallthru
      _
    // Predicated region
    $region10: #{actor_forward.1} parent=1 // pred_check
      _
    $region11: #{actor_forward.1} parent=1 // pred_check_branch
      %24 = sbr.rel (0) target = $region13
    $region12: #{actor_forward.1} parent=1 // pred_region
      _
    $region13: #{actor_forward.1} parent=1 // pred_fallthru
      _
    // Predicated region
    $region14: #{actor_forward.1} parent=1 // pred_check
      _
    $region15: #{actor_forward.1} parent=1 // pred_check_branch
      %26 = sbr.rel (0) target = $region17
    $region16: #{actor_forward.1} parent=1 // pred_region
      %27 = dma.done [#allocation3], 8448
    $region17: #{actor_forward.1} parent=1 // pred_fallthru
      _
    %v29 = vld [vmem:[%s0] sm:$0xf]
    %v30 = vld [vmem:[#allocation2] sm:$0xff]
    %v31 = vld [vmem:[#allocation2 + $0x8] sm:$0xff]
    %v32 = vld [vmem:[%s2] ss:$4 sm:$0x3]
    %v34 = vlaneseq
    %v35 = vshrl.u32 %v34, 7
    %v36 = vsub.s32 0, %v35
    %v37 = vrot.slane %v32, %v36
    %v38 = vlaneseq
    %v39 = vshrl.u32 %v38, 7
    %v40 = vsub.s32 1, %v39
    %v41 = vrot.slane %v32, %v40
    %v46 = vunpack.c.l.b16 %v30
    %v47 = vunpack.c.h.b16 %v30
    %v48 = vunpack.c.l.b16 %v31
    %v49 = vunpack.c.h.b16 %v31
    %v50 = vpack.c.b16 %v48, %v46
    %v51 = vpack.c.b16 %v49, %v47
    %vm54 = vcmask 130048
    %v56 = vsel %vm54, %v29, 0
    %58 = vmatprep.subr.bf16.mxu0 0
    %59 = vmatpush1.bf16.msra.mxu0 0
    %60 = vmatprep.subr.bf16.mxu0 0
    %61 = vmatpush1.bf16.msra.mxu0 0
    %62 = vmatprep.subr.bf16.mxu0 0
    %63 = vmatpush1.bf16.msra.mxu0 0
    %64 = vmatprep.subr.bf16.mxu0 0
    %65 = vmatpush1.bf16.msra.mxu0 0
    %66 = vmatprep.subr.bf16.mxu0 0
    %67 = vmatpush1.bf16.msra.mxu0 0
    %68 = vmatprep.subr.bf16.mxu0 0
    %69 = vmatpush1.bf16.msra.mxu0 0
    %70 = vmatprep.subr.bf16.mxu0 0
    %71 = vmatpush1.bf16.msra.mxu0 0
    %72 = vmatprep.subr.bf16.mxu0 %v51
    %73 = vmatpush1.bf16.msra.mxu0 %v50
    %74 = vmatprep.subr.bf16.mxu0 0
    %75 = vmatpush2.bf16.msra.mxu0 0
    %76 = vmatprep.subr.bf16.mxu0 0
    %77 = vmatpush2.bf16.msra.mxu0 0
    %78 = vmatprep.subr.bf16.mxu0 0
    %79 = vmatpush2.bf16.msra.mxu0 0
    %80 = vmatprep.subr.bf16.mxu0 0
    %81 = vmatpush2.bf16.msra.mxu0 0
    %82 = vmatprep.subr.bf16.mxu0 0
    %83 = vmatpush2.bf16.msra.mxu0 0
    %84 = vmatprep.subr.bf16.mxu0 0
    %85 = vmatpush2.bf16.msra.mxu0 0
    %86 = vmatprep.subr.bf16.mxu0 0
    %87 = vmatpush2.bf16.msra.mxu0 0
    %88 = vmatprep.subr.bf16.mxu0 0
    %89 = vmatpush2.bf16.msra.mxu0 0
    %90 = vmatprep.mubr.bf16.mxu0 0
    %91 = vmatmul.mubr.bf16.gmra.mxu0 %v56
    %v92 = vpop.f32.mrf.mxu0
    %v93 = vadd.f32 %v37, %v92
    %v94 = vpop.f32.mrf.mxu0
    %v95 = vadd.f32 %v41, %v94
    %v96 = vpop.f32.mrf.mxu0
    %v97 = vpop.f32.mrf.mxu0
    %98 = vdwg.mxu0
    %v99 = vmax.f32 %v93, 0.0
    %v100 = vmax.f32 %v95, 0.0
    %v101 = vpack.c.bf16 %v99, %v99
    %v102 = vpack.c.bf16 %v100, %v100
    %v103 = vld [vmem:[#allocation2 + $0x10] sm:$0xff]
    %v104 = vld [vmem:[#allocation2 + $0x18] sm:$0xff]
    %v105 = vld [vmem:[#allocation2 + $0x20] sm:$0xff]
    %v106 = vld [vmem:[#allocation2 + $0x28] sm:$0xff]
    %v107 = vld [vmem:[#allocation2 + $0x30] sm:$0xff]
    %v108 = vld [vmem:[#allocation2 + $0x38] sm:$0xff]
    %v109 = vld [vmem:[#allocation2 + $0x40] sm:$0xff]
    %v110 = vld [vmem:[#allocation2 + $0x48] sm:$0xff]
    %v111 = vld [vmem:[#allocation2 + $0x50] sm:$0xff]
    %v112 = vld [vmem:[#allocation2 + $0x58] sm:$0xff]
    %v113 = vld [vmem:[#allocation2 + $0x60] sm:$0xff]
    %v114 = vld [vmem:[#allocation2 + $0x68] sm:$0xff]
    %v115 = vld [vmem:[#allocation2 + $0x70] sm:$0xff]
    %v116 = vld [vmem:[#allocation2 + $0x78] sm:$0xff]
    %v117 = vld [vmem:[#allocation2 + $0x80] sm:$0xff]
    %v118 = vld [vmem:[#allocation2 + $0x88] sm:$0xff]
    %v119 = vld [vmem:[#allocation2 + $0x90] sm:$0xff]
    %v120 = vld [vmem:[#allocation2 + $0x98] sm:$0xff]
    %v121 = vld [vmem:[#allocation2 + $0xa0] sm:$0xff]
    %v122 = vld [vmem:[#allocation2 + $0xa8] sm:$0xff]
    %v123 = vld [vmem:[#allocation2 + $0xb0] sm:$0xff]
    %v124 = vld [vmem:[#allocation2 + $0xb8] sm:$0xff]
    %v125 = vld [vmem:[#allocation2 + $0xc0] sm:$0xff]
    %v126 = vld [vmem:[#allocation2 + $0xc8] sm:$0xff]
    %v127 = vld [vmem:[#allocation2 + $0xd0] sm:$0xff]
    %v128 = vld [vmem:[#allocation2 + $0xd8] sm:$0xff]
    %v129 = vld [vmem:[#allocation2 + $0xe0] sm:$0xff]
    %v130 = vld [vmem:[#allocation2 + $0xe8] sm:$0xff]
    %v131 = vld [vmem:[#allocation2 + $0xf0] sm:$0xff]
    %v132 = vld [vmem:[#allocation2 + $0xf8] sm:$0xff]
    %v133 = vld [vmem:[#allocation2 + $0x100] sm:$0xff]
    %v134 = vld [vmem:[#allocation2 + $0x108] sm:$0xff]
    %s135 = scalar_lea.vmem %s2, 1
    %v136 = vld [vmem:[%s135] ss:$4 sm:$0x3]
    %v138 = vlaneseq
    %v139 = vshrl.u32 %v138, 7
    %v140 = vsub.s32 0, %v139
    %v141 = vrot.slane %v136, %v140
    %v142 = vlaneseq
    %v143 = vshrl.u32 %v142, 7
    %v144 = vsub.s32 1, %v143
    %v145 = vrot.slane %v136, %v144
    %v180 = vunpack.c.l.b16 %v103
    %v181 = vunpack.c.h.b16 %v103
    %v182 = vunpack.c.l.b16 %v104
    %v183 = vunpack.c.h.b16 %v104
    %v184 = vunpack.c.l.b16 %v105
    %v185 = vunpack.c.h.b16 %v105
    %v186 = vunpack.c.l.b16 %v106
    %v187 = vunpack.c.h.b16 %v106
    %v188 = vunpack.c.l.b16 %v107
    %v189 = vunpack.c.h.b16 %v107
    %v190 = vunpack.c.l.b16 %v108
    %v191 = vunpack.c.h.b16 %v108
    %v192 = vunpack.c.l.b16 %v109
    %v193 = vunpack.c.h.b16 %v109
    %v194 = vunpack.c.l.b16 %v110
    %v195 = vunpack.c.h.b16 %v110
    %v196 = vunpack.c.l.b16 %v111
    %v197 = vunpack.c.h.b16 %v111
    %v198 = vunpack.c.l.b16 %v112
    %v199 = vunpack.c.h.b16 %v112
    %v200 = vunpack.c.l.b16 %v113
    %v201 = vunpack.c.h.b16 %v113
    %v202 = vunpack.c.l.b16 %v114
    %v203 = vunpack.c.h.b16 %v114
    %v204 = vunpack.c.l.b16 %v115
    %v205 = vunpack.c.h.b16 %v115
    %v206 = vunpack.c.l.b16 %v116
    %v207 = vunpack.c.h.b16 %v116
    %v208 = vunpack.c.l.b16 %v117
    %v209 = vunpack.c.h.b16 %v117
    %v210 = vunpack.c.l.b16 %v118
    %v211 = vunpack.c.h.b16 %v118
    %v212 = vunpack.c.l.b16 %v119
    %v213 = vunpack.c.h.b16 %v119
    %v214 = vunpack.c.l.b16 %v120
    %v215 = vunpack.c.h.b16 %v120
    %v216 = vunpack.c.l.b16 %v121
    %v217 = vunpack.c.h.b16 %v121
    %v218 = vunpack.c.l.b16 %v122
    %v219 = vunpack.c.h.b16 %v122
    %v220 = vunpack.c.l.b16 %v123
    %v221 = vunpack.c.h.b16 %v123
    %v222 = vunpack.c.l.b16 %v124
    %v223 = vunpack.c.h.b16 %v124
    %v224 = vunpack.c.l.b16 %v125
    %v225 = vunpack.c.h.b16 %v125
    %v226 = vunpack.c.l.b16 %v126
    %v227 = vunpack.c.h.b16 %v126
    %v228 = vunpack.c.l.b16 %v127
    %v229 = vunpack.c.h.b16 %v127
    %v230 = vunpack.c.l.b16 %v128
    %v231 = vunpack.c.h.b16 %v128
    %v232 = vunpack.c.l.b16 %v129
    %v233 = vunpack.c.h.b16 %v129
    %v234 = vunpack.c.l.b16 %v130
    %v235 = vunpack.c.h.b16 %v130
    %v236 = vunpack.c.l.b16 %v131
    %v237 = vunpack.c.h.b16 %v131
    %v238 = vunpack.c.l.b16 %v132
    %v239 = vunpack.c.h.b16 %v132
    %v240 = vunpack.c.l.b16 %v133
    %v241 = vunpack.c.h.b16 %v133
    %v242 = vunpack.c.l.b16 %v134
    %v243 = vunpack.c.h.b16 %v134
    %v244 = vpack.c.b16 %v182, %v180
    %v245 = vpack.c.b16 %v183, %v181
    %v246 = vpack.c.b16 %v186, %v184
    %v247 = vpack.c.b16 %v187, %v185
    %v248 = vpack.c.b16 %v190, %v188
    %v249 = vpack.c.b16 %v191, %v189
    %v250 = vpack.c.b16 %v194, %v192
    %v251 = vpack.c.b16 %v195, %v193
    %v252 = vpack.c.b16 %v198, %v196
    %v253 = vpack.c.b16 %v199, %v197
    %v254 = vpack.c.b16 %v202, %v200
    %v255 = vpack.c.b16 %v203, %v201
    %v256 = vpack.c.b16 %v206, %v204
    %v257 = vpack.c.b16 %v207, %v205
    %v258 = vpack.c.b16 %v210, %v208
    %v259 = vpack.c.b16 %v211, %v209
    %v260 = vpack.c.b16 %v214, %v212
    %v261 = vpack.c.b16 %v215, %v213
    %v262 = vpack.c.b16 %v218, %v216
    %v263 = vpack.c.b16 %v219, %v217
    %v264 = vpack.c.b16 %v222, %v220
    %v265 = vpack.c.b16 %v223, %v221
    %v266 = vpack.c.b16 %v226, %v224
    %v267 = vpack.c.b16 %v227, %v225
    %v268 = vpack.c.b16 %v230, %v228
    %v269 = vpack.c.b16 %v231, %v229
    %v270 = vpack.c.b16 %v234, %v232
    %v271 = vpack.c.b16 %v235, %v233
    %v272 = vpack.c.b16 %v238, %v236
    %v273 = vpack.c.b16 %v239, %v237
    %v274 = vpack.c.b16 %v242, %v240
    %v275 = vpack.c.b16 %v243, %v241
    %308 = vmatprep.subr.bf16.mxu0 %v259
    %309 = vmatpush1.bf16.msra.mxu0 %v258
    %310 = vmatprep.subr.bf16.mxu0 %v257
    %311 = vmatpush1.bf16.msra.mxu0 %v256
    %312 = vmatprep.subr.bf16.mxu0 %v255
    %313 = vmatpush1.bf16.msra.mxu0 %v254
    %314 = vmatprep.subr.bf16.mxu0 %v253
    %315 = vmatpush1.bf16.msra.mxu0 %v252
    %316 = vmatprep.subr.bf16.mxu0 %v251
    %317 = vmatpush1.bf16.msra.mxu0 %v250
    %318 = vmatprep.subr.bf16.mxu0 %v249
    %319 = vmatpush1.bf16.msra.mxu0 %v248
    %320 = vmatprep.subr.bf16.mxu0 %v247
    %321 = vmatpush1.bf16.msra.mxu0 %v246
    %322 = vmatprep.subr.bf16.mxu0 %v245
    %323 = vmatpush1.bf16.msra.mxu0 %v244
    %324 = vmatprep.subr.bf16.mxu0 %v275
    %325 = vmatpush2.bf16.msra.mxu0 %v274
    %326 = vmatprep.subr.bf16.mxu0 %v273
    %327 = vmatpush2.bf16.msra.mxu0 %v272
    %328 = vmatprep.subr.bf16.mxu0 %v271
    %329 = vmatpush2.bf16.msra.mxu0 %v270
    %330 = vmatprep.subr.bf16.mxu0 %v269
    %331 = vmatpush2.bf16.msra.mxu0 %v268
    %332 = vmatprep.subr.bf16.mxu0 %v267
    %333 = vmatpush2.bf16.msra.mxu0 %v266
    %334 = vmatprep.subr.bf16.mxu0 %v265
    %335 = vmatpush2.bf16.msra.mxu0 %v264
    %336 = vmatprep.subr.bf16.mxu0 %v263
    %337 = vmatpush2.bf16.msra.mxu0 %v262
    %338 = vmatprep.subr.bf16.mxu0 %v261
    %339 = vmatpush2.bf16.msra.mxu0 %v260
    %340 = vmatprep.mubr.bf16.mxu0 %v102
    %341 = vmatmul.mubr.bf16.gmra.mxu0 %v101
    %v342 = vpop.f32.mrf.mxu0
    %v343 = vadd.f32 %v141, %v342
    %v344 = vpop.f32.mrf.mxu0
    %v345 = vadd.f32 %v145, %v344
    %v346 = vpop.f32.mrf.mxu0
    %v347 = vpop.f32.mrf.mxu0
    %348 = vdwg.mxu0
    %v349 = vmax.f32 %v343, 0.0
    %v350 = vmax.f32 %v345, 0.0
    %v351 = vpack.c.bf16 %v349, %v349
    %v352 = vpack.c.bf16 %v350, %v350
    %v353 = vld [vmem:[#allocation2 + $0x110] sm:$0xf]
    %v354 = vld [vmem:[#allocation2 + $0x118] sm:$0xf]
    %v355 = vld [vmem:[#allocation2 + $0x120] sm:$0xf]
    %v356 = vld [vmem:[#allocation2 + $0x128] sm:$0xf]
    %v357 = vld [vmem:[#allocation2 + $0x130] sm:$0xf]
    %v358 = vld [vmem:[#allocation2 + $0x138] sm:$0xf]
    %v359 = vld [vmem:[#allocation2 + $0x140] sm:$0xf]
    %v360 = vld [vmem:[#allocation2 + $0x148] sm:$0xf]
    %v361 = vld [vmem:[#allocation2 + $0x150] sm:$0xf]
    %v362 = vld [vmem:[#allocation2 + $0x158] sm:$0xf]
    %v363 = vld [vmem:[#allocation2 + $0x160] sm:$0xf]
    %v364 = vld [vmem:[#allocation2 + $0x168] sm:$0xf]
    %v365 = vld [vmem:[#allocation2 + $0x170] sm:$0xf]
    %v366 = vld [vmem:[#allocation2 + $0x178] sm:$0xf]
    %v367 = vld [vmem:[#allocation2 + $0x180] sm:$0xf]
    %v368 = vld [vmem:[#allocation2 + $0x188] sm:$0xf]
    %v369 = vld [vmem:[#allocation2 + $0x190] sm:$0xf]
    %v370 = vld [vmem:[#allocation2 + $0x198] sm:$0xf]
    %v371 = vld [vmem:[#allocation2 + $0x1a0] sm:$0xf]
    %v372 = vld [vmem:[#allocation2 + $0x1a8] sm:$0xf]
    %v373 = vld [vmem:[#allocation2 + $0x1b0] sm:$0xf]
    %v374 = vld [vmem:[#allocation2 + $0x1b8] sm:$0xf]
    %v375 = vld [vmem:[#allocation2 + $0x1c0] sm:$0xf]
    %v376 = vld [vmem:[#allocation2 + $0x1c8] sm:$0xf]
    %v377 = vld [vmem:[#allocation2 + $0x1d0] sm:$0xf]
    %v378 = vld [vmem:[#allocation2 + $0x1d8] sm:$0xf]
    %v379 = vld [vmem:[#allocation2 + $0x1e0] sm:$0xf]
    %v380 = vld [vmem:[#allocation2 + $0x1e8] sm:$0xf]
    %v381 = vld [vmem:[#allocation2 + $0x1f0] sm:$0xf]
    %v382 = vld [vmem:[#allocation2 + $0x1f8] sm:$0xf]
    %v383 = vld [vmem:[#allocation2 + $0x200] sm:$0xf]
    %v384 = vld [vmem:[#allocation2 + $0x208] sm:$0xf]
    %v385 = vld [vmem:[%s2 + $0x2] sm:$0x1]
    %v386 = vlaneseq
    %v387 = vshrl.u32 %v386, 7
    %v388 = vsub.s32 0, %v387
    %v389 = vrot.slane %v385, %v388
    %v422 = vunpack.c.l.b16 %v353
    %v423 = vunpack.c.l.b16 %v354
    %v424 = vunpack.c.l.b16 %v355
    %v425 = vunpack.c.l.b16 %v356
    %v426 = vunpack.c.l.b16 %v357
    %v427 = vunpack.c.l.b16 %v358
    %v428 = vunpack.c.l.b16 %v359
    %v429 = vunpack.c.l.b16 %v360
    %v430 = vunpack.c.l.b16 %v361
    %v431 = vunpack.c.l.b16 %v362
    %v432 = vunpack.c.l.b16 %v363
    %v433 = vunpack.c.l.b16 %v364
    %v434 = vunpack.c.l.b16 %v365
    %v435 = vunpack.c.l.b16 %v366
    %v436 = vunpack.c.l.b16 %v367
    %v437 = vunpack.c.l.b16 %v368
    %v438 = vunpack.c.l.b16 %v369
    %v439 = vunpack.c.l.b16 %v370
    %v440 = vunpack.c.l.b16 %v371
    %v441 = vunpack.c.l.b16 %v372
    %v442 = vunpack.c.l.b16 %v373
    %v443 = vunpack.c.l.b16 %v374
    %v444 = vunpack.c.l.b16 %v375
    %v445 = vunpack.c.l.b16 %v376
    %v446 = vunpack.c.l.b16 %v377
    %v447 = vunpack.c.l.b16 %v378
    %v448 = vunpack.c.l.b16 %v379
    %v449 = vunpack.c.l.b16 %v380
    %v450 = vunpack.c.l.b16 %v381
    %v451 = vunpack.c.l.b16 %v382
    %v452 = vunpack.c.l.b16 %v383
    %v453 = vunpack.c.l.b16 %v384
    %v454 = vpack.c.b16 %v423, %v422
    %v455 = vpack.c.b16 %v425, %v424
    %v456 = vpack.c.b16 %v427, %v426
    %v457 = vpack.c.b16 %v429, %v428
    %v458 = vpack.c.b16 %v431, %v430
    %v459 = vpack.c.b16 %v433, %v432
    %v460 = vpack.c.b16 %v435, %v434
    %v461 = vpack.c.b16 %v437, %v436
    %v462 = vpack.c.b16 %v439, %v438
    %v463 = vpack.c.b16 %v441, %v440
    %v464 = vpack.c.b16 %v443, %v442
    %v465 = vpack.c.b16 %v445, %v444
    %v466 = vpack.c.b16 %v447, %v446
    %v467 = vpack.c.b16 %v449, %v448
    %v468 = vpack.c.b16 %v451, %v450
    %v469 = vpack.c.b16 %v453, %v452
    %486 = vmatprep.subr.bf16.mxu0 0
    %487 = vmatpush1.bf16.msra.mxu0 %v461
    %488 = vmatprep.subr.bf16.mxu0 0
    %489 = vmatpush1.bf16.msra.mxu0 %v460
    %490 = vmatprep.subr.bf16.mxu0 0
    %491 = vmatpush1.bf16.msra.mxu0 %v459
    %492 = vmatprep.subr.bf16.mxu0 0
    %493 = vmatpush1.bf16.msra.mxu0 %v458
    %494 = vmatprep.subr.bf16.mxu0 0
    %495 = vmatpush1.bf16.msra.mxu0 %v457
    %496 = vmatprep.subr.bf16.mxu0 0
    %497 = vmatpush1.bf16.msra.mxu0 %v456
    %498 = vmatprep.subr.bf16.mxu0 0
    %499 = vmatpush1.bf16.msra.mxu0 %v455
    %500 = vmatprep.subr.bf16.mxu0 0
    %501 = vmatpush1.bf16.msra.mxu0 %v454
    %502 = vmatprep.subr.bf16.mxu0 0
    %503 = vmatpush2.bf16.msra.mxu0 %v469
    %504 = vmatprep.subr.bf16.mxu0 0
    %505 = vmatpush2.bf16.msra.mxu0 %v468
    %506 = vmatprep.subr.bf16.mxu0 0
    %507 = vmatpush2.bf16.msra.mxu0 %v467
    %508 = vmatprep.subr.bf16.mxu0 0
    %509 = vmatpush2.bf16.msra.mxu0 %v466
    %510 = vmatprep.subr.bf16.mxu0 0
    %511 = vmatpush2.bf16.msra.mxu0 %v465
    %512 = vmatprep.subr.bf16.mxu0 0
    %513 = vmatpush2.bf16.msra.mxu0 %v464
    %514 = vmatprep.subr.bf16.mxu0 0
    %515 = vmatpush2.bf16.msra.mxu0 %v463
    %516 = vmatprep.subr.bf16.mxu0 0
    %517 = vmatpush2.bf16.msra.mxu0 %v462
    %518 = vmatprep.mubr.bf16.mxu0 %v352
    %519 = vmatmul.mubr.bf16.gmra.mxu0 %v351
    %v520 = vpop.f32.mrf.mxu0
    %v521 = vadd.f32 %v389, %v520
    %v522 = vpop.f32.mrf.mxu0
    %v523 = vpop.f32.mrf.mxu0
    %v524 = vpop.f32.mrf.mxu0
    %525 = vdwg.mxu0
    %v526 = vtanh.pop %v521
    %527 = vst [vmem:[%s3] sm:$0xff] %v526
    // Predicated region
    $region18: #{actor_forward.1} parent=1 // pred_check
      _
    $region19: #{actor_forward.1} parent=1 // pred_check_branch
      %529 = sbr.rel (0) target = $region21
    $region20: #{actor_forward.1} parent=1 // pred_region
      _
    $region21: #{actor_forward.1} parent=1 // pred_fallthru
      _
    // Predicated region
    $region22: #{actor_forward.1} parent=1 // pred_check
      _
    $region23: #{actor_forward.1} parent=1 // pred_check_branch
      %531 = sbr.rel (0) target = $region25
    $region24: #{actor_forward.1} parent=1 // pred_region
      _
    $region25: #{actor_forward.1} parent=1 // pred_fallthru
      _
    %532 = vsyncpa [#allocation3], 1

</llo_original>
